<compile_context>
chip_gen: v6e
topology: v6e:2x2x1
jax: 0.10.0
libtpu: 0.0.40
codegen_flags: <defaults>
</compile_context>

<pallas_src>
import functools

import jax
import jax.numpy as jnp
from jax import lax
from jax.experimental import pallas as pl
from jax.experimental.pallas import tpu as pltpu


# --------------------------------------------------------------------------- #
# Kernels
# --------------------------------------------------------------------------- #
def _projection_kernel(x_ref, w_ref, b_ref, th_ref, phi_ref, g_ref,
                       *, ci_pad, theta_scale):
    """Grid = (batch, hw_tile).  Both axes megacore-parallel.

    x_ref   : (1, C, TP)        input feature tile, channels-first tokens, f32
    w_ref   : (3*Ci_pad, C)     stacked [theta; phi; g] 1x1-conv weights
    b_ref   : (3*Ci_pad, 1)     stacked biases
    th_ref, phi_ref, g_ref : (1, Ci_pad, TP) outputs (compute_dtype)
    """
    proj = jnp.dot(w_ref[...], x_ref[0],
                   preferred_element_type=jnp.float32) + b_ref[...]   # (3Ci, TP)
    th = proj[0:ci_pad]
    if theta_scale != 1.0:
        # use_scale (embedded_gaussian) / 1-over-HW (dot_product) folded into
        # theta: O(HW*Ci) work instead of O(HW^2) on the pairwise matrix.
        th = th * theta_scale
    th_ref[0] = th.astype(th_ref.dtype)
    phi_ref[0] = proj[ci_pad:2 * ci_pad].astype(phi_ref.dtype)
    g_ref[0] = proj[2 * ci_pad:3 * ci_pad].astype(g_ref.dtype)


def _attention_kernel(xq_ref, th_ref, phi_ref, g_ref, wo_ref, bo_ref, out_ref,
                      *, mode, compute_dtype, approx_recip):
    """Grid = (batch, query_tile).  Both axes megacore-parallel.

    xq_ref  : (1, C, TQ)       query tile of x (residual), f32
    th_ref  : (1, Ci_pad, TQ)  theta tile (scale already folded in)
    phi_ref : (1, Ci_pad, HW)  full-image phi (keys)
    g_ref   : (1, Ci_pad, HW)  full-image g
    wo_ref  : (C, Ci_pad), bo_ref : (C, 1) : conv_out weights / bias
    out_ref : (1, C, TQ)
    """
    # One small (Ci_pad, TQ) -> (TQ, Ci_pad) transpose.  A transposed-LHS
    # dot_general is not guaranteed to lower on all Mosaic versions, so the
    # explicit .T (proven to lower) is kept.
    theta_t = th_ref[0].T                                              # (TQ, Ci)

    # Pairwise logits (TQ, HW): bf16 (or f32) MXU operands, f32 accumulation.
    pw = jnp.dot(theta_t, phi_ref[0],
                 preferred_element_type=jnp.float32)                   # (TQ, HW)

    if mode == 'embedded_gaussian':
        m = jnp.max(pw, axis=-1, keepdims=True)
        e = jnp.exp(pw - m)                                            # f32
        s = jnp.sum(e, axis=-1, keepdims=True)                         # (TQ, 1)
        p = e.astype(compute_dtype)                                    # unnormalized
        # Normalization folded into the (Ci, TQ) epilogue below instead of an
        # O(TQ*HW) multiply on the pairwise matrix.
        inv_row = pl.reciprocal(s, approx=approx_recip).T              # (1, TQ)
    else:  # dot_product: the 1/HW factor was folded into theta already.
        p = pw.astype(compute_dtype)
        inv_row = None

    # y[ci, q] = sum_k g[ci, k] * p[q, k] -- transposed contraction, no .T on p.
    y = lax.dot_general(
        g_ref[0], p,
        dimension_numbers=(((1,), (1,)), ((), ())),
        preferred_element_type=jnp.float32)                            # (Ci, TQ)
    if inv_row is not None:
        y = y * inv_row                                                # O(Ci*TQ)

    # conv_out (1x1) + residual, all f32, lane-dense (C, TQ) store.
    out_ref[0] = (xq_ref[0]
                  + jnp.dot(wo_ref[...], y, preferred_element_type=jnp.float32)
                  + bo_ref[...]).astype(out_ref.dtype)


# --------------------------------------------------------------------------- #
# Wrapper
# --------------------------------------------------------------------------- #
def _vmem_capacity_bytes():
    try:
        return int(pltpu.get_tpu_info().vmem_capacity_bytes)
    except Exception:
        return 128 * 1024 * 1024


def _vmem_limit(est_bytes, cap_bytes):
    # Leave headroom for Mosaic internal scratch; demand-driven below the cap.
    headroom = 8 * 1024 * 1024
    limit = min(cap_bytes - headroom, max(32 * 1024 * 1024, 2 * int(est_bytes)))
    return int(max(limit, 16 * 1024 * 1024))


def _pick_tile(hw, target):
    """Largest multiple of 128 that divides hw and is <= target, else hw."""
    if hw <= target:
        return hw
    t = (target // 128) * 128
    while t >= 128:
        if hw % t == 0:
            return t
        t -= 128
    return hw


def nonlocal_block_2d(x_nchw, params, *, use_scale=True,
                      mode='embedded_gaussian', tq=None, tp=None,
                      compute_dtype=jnp.bfloat16, ci_pad_multiple=128):
    """x_nchw: (N, C, H, W) f32.  params: 1x1-conv weights (Cout, Cin), biases (Cout, 1).

    Note: this mirrors the given PyTorch source, where use_scale does
    `pairwise_weight /= theta_x.shape[-1] ** (-0.5)`, i.e. it MULTIPLIES the
    logits by sqrt(inter_channels).  (Canonical mmcv NonLocal2d divides.)
    """
    assert mode in ('embedded_gaussian', 'dot_product')
    n, c, h, w = x_nchw.shape
    hw = h * w
    ci = params['wg'].shape[0]

    cap = _vmem_capacity_bytes()
    if tq is None:
        # Bigger query tiles on 128 MiB parts (v5e/v6e); 256 on 64 MiB v7x.
        tq = 512 if cap >= 100 * 1024 * 1024 else 256
    if tp is None:
        tp = 512
    tq = _pick_tile(hw, tq)
    tp = _pick_tile(hw, tp)

    # Pad inter_channels to the lane / MXU tile.  Padded rows / bias rows /
    # conv_out columns are exact zeros => results unchanged, MXU better fed.
    ci_pad = ((ci + ci_pad_multiple - 1) // ci_pad_multiple) * ci_pad_multiple

    def _pad_rows(wm, bm):
        return (jnp.pad(wm, ((0, ci_pad - ci), (0, 0))),
                jnp.pad(bm, ((0, ci_pad - ci), (0, 0))))

    wt_p, bt_p = _pad_rows(params['wt'], params['bt'])
    wp_p, bp_p = _pad_rows(params['wp'], params['bp'])
    wg_p, bg_p = _pad_rows(params['wg'], params['bg'])
    # Stacked projection weights: theta + phi + g in a single MXU matmul.
    w_all = jnp.concatenate([wt_p, wp_p, wg_p], axis=0)            # (3*Ci_pad, C)
    b_all = jnp.concatenate([bt_p, bp_p, bg_p], axis=0)            # (3*Ci_pad, 1)
    wo_p = jnp.pad(params['wo'], ((0, 0), (0, ci_pad - ci)))       # (C, Ci_pad)
    bo = params['bo']

    x_tok = x_nchw.reshape(n, c, hw)    # pure reshape; no HBM transpose

    if mode == 'embedded_gaussian':
        theta_scale = float(ci) ** 0.5 if use_scale else 1.0       # multiply by sqrt(Ci)
    else:
        theta_scale = 1.0 / float(hw)                              # fold 1/HW into theta

    cds = jnp.dtype(compute_dtype).itemsize
    approx_recip = bool(jnp.dtype(compute_dtype) != jnp.dtype(jnp.float32))

    # ----------------------- projection kernel: theta / phi / g (full image).
    proj_kernel = functools.partial(
        _projection_kernel, ci_pad=ci_pad, theta_scale=theta_scale)

    proj_vmem = (2 * c * tp * 4                       # x tile (double buffered)
                 + 3 * ci_pad * (c + 1) * 4           # stacked weights + bias
                 + 3 * 2 * ci_pad * tp * cds          # three outputs (double buffered)
                 + 3 * ci_pad * tp * 4)               # f32 matmul result
    proj_flops = 2 * n * hw * 3 * ci_pad * c
    proj_bytes = (4 * n * c * hw + 3 * n * ci_pad * hw * cds
                  + 4 * 3 * ci_pad * (c + 1))

    theta_a, phi_a, g_a = pl.pallas_call(
        proj_kernel,
        out_shape=(jax.ShapeDtypeStruct((n, ci_pad, hw), compute_dtype),
                   jax.ShapeDtypeStruct((n, ci_pad, hw), compute_dtype),
                   jax.ShapeDtypeStruct((n, ci_pad, hw), compute_dtype)),
        grid_spec=pltpu.PrefetchScalarGridSpec(
            num_scalar_prefetch=0,
            grid=(n, hw // tp),
            in_specs=[
                pl.BlockSpec((1, c, tp), lambda b, t: (b, 0, t)),        # x tile
                pl.BlockSpec((3 * ci_pad, c), lambda b, t: (0, 0)),      # stacked W
                pl.BlockSpec((3 * ci_pad, 1), lambda b, t: (0, 0)),      # stacked b
            ],
            out_specs=[
                pl.BlockSpec((1, ci_pad, tp), lambda b, t: (b, 0, t)),   # theta
                pl.BlockSpec((1, ci_pad, tp), lambda b, t: (b, 0, t)),   # phi
                pl.BlockSpec((1, ci_pad, tp), lambda b, t: (b, 0, t)),   # g
            ],
        ),
        compiler_params=pltpu.CompilerParams(
            dimension_semantics=("parallel", "parallel"),
            vmem_limit_bytes=_vmem_limit(proj_vmem, cap)),
        cost_estimate=pl.CostEstimate(
            flops=int(proj_flops), transcendentals=0,
            bytes_accessed=int(proj_bytes)),
    )(x_tok, w_all, b_all)

    # ------------- attention kernel: logits, softmax, y, conv_out + residual.
    attn_kernel = functools.partial(
        _attention_kernel, mode=mode, compute_dtype=compute_dtype,
        approx_recip=approx_recip)

    attn_vmem = (2 * c * tq * 4                       # x query tile
                 + 2 * ci_pad * tq * cds              # theta tile
                 + 2 * 2 * ci_pad * hw * cds          # phi + g (double buffered)
                 + 2 * c * tq * 4                     # out tile
                 + c * (ci_pad + 1) * 4               # wo, bo
                 + 2 * tq * hw * 4                    # pw + exp temporaries (f32)
                 + tq * hw * cds                      # p in compute dtype
                 + (ci_pad + c) * tq * 4)             # y / epilogue temps
    attn_flops = n * (4 * hw * hw * ci_pad + 2 * hw * c * ci_pad)
    attn_trans = n * hw * hw if mode == 'embedded_gaussian' else 0
    attn_bytes = (2 * 4 * n * c * hw                  # x in, out
                  + 3 * n * ci_pad * hw * cds         # theta (tiled) + phi + g
                  + 4 * c * (ci_pad + 1))

    out_tok = pl.pallas_call(
        attn_kernel,
        out_shape=jax.ShapeDtypeStruct((n, c, hw), x_nchw.dtype),
        grid_spec=pltpu.PrefetchScalarGridSpec(
            num_scalar_prefetch=0,
            grid=(n, hw // tq),
            in_specs=[
                pl.BlockSpec((1, c, tq), lambda b, q: (b, 0, q)),        # x query tile
                pl.BlockSpec((1, ci_pad, tq), lambda b, q: (b, 0, q)),   # theta tile
                pl.BlockSpec((1, ci_pad, hw), lambda b, q: (b, 0, 0)),   # phi (keys)
                pl.BlockSpec((1, ci_pad, hw), lambda b, q: (b, 0, 0)),   # g
                pl.BlockSpec((c, ci_pad), lambda b, q: (0, 0)),          # conv_out W
                pl.BlockSpec((c, 1), lambda b, q: (0, 0)),               # conv_out b
            ],
            out_specs=pl.BlockSpec((1, c, tq), lambda b, q: (b, 0, q)),
        ),
        compiler_params=pltpu.CompilerParams(
            dimension_semantics=("parallel", "parallel"),
            vmem_limit_bytes=_vmem_limit(attn_vmem, cap)),
        cost_estimate=pl.CostEstimate(
            flops=int(attn_flops), transcendentals=int(attn_trans),
            bytes_accessed=int(attn_bytes)),
    )(x_tok, theta_a, phi_a, g_a, wo_p, bo)

    return out_tok.reshape(n, c, h, w)


# --------------------------------------------------------------------------- #
# Reference & parameters
# --------------------------------------------------------------------------- #
def _reference(x_nchw, params, *, use_scale=True, mode='embedded_gaussian'):
    """Plain-JAX reference mirroring the PyTorch forward exactly."""
    n, c, h, w = x_nchw.shape
    hw = h * w
    ci = params['wg'].shape[0]
    xt = x_nchw.reshape(n, c, hw)                                     # (N, C, HW)
    conv = lambda wm, b, t: jnp.einsum('oc,nch->noh', wm, t) + b[None]
    g = conv(params['wg'], params['bg'], xt)                          # (N, Ci, HW)
    th = conv(params['wt'], params['bt'], xt)
    ph = conv(params['wp'], params['bp'], xt)
    pw = jnp.einsum('ncq,nck->nqk', th, ph)                           # (N, HW, HW)
    if mode == 'embedded_gaussian':
        if use_scale:
            pw = pw / (float(ci) ** (-0.5))   # exactly mirrors the PyTorch code
        pw = jax.nn.softmax(pw, axis=-1)
    else:
        pw = pw / float(pw.shape[-1])
    y = jnp.einsum('nqk,nck->ncq', pw, g)                             # (N, Ci, HW)
    out = xt + conv(params['wo'], params['bo'], y)
    return out.reshape(n, c, h, w)


def make_params(key, in_channels, reduction=2):
    """Synthetic parameters matching nn.Conv2d(cin, cout, 1) shapes:
    weight (Cout, Cin), bias (Cout, 1)."""
    ci = in_channels // reduction
    ks = jax.random.split(key, 8)

    def wb(kw, kb, cin, cout):
        bound = 1.0 / (cin ** 0.5)
        wm = jax.random.uniform(kw, (cout, cin), jnp.float32, -bound, bound)
        bv = jax.random.uniform(kb, (cout, 1), jnp.float32, -bound, bound)
        return wm, bv

    wg, bg = wb(ks[0], ks[1], in_channels, ci)
    wt, bt = wb(ks[2], ks[3], in_channels, ci)
    wp, bp = wb(ks[4], ks[5], in_channels, ci)
    wo, bo = wb(ks[6], ks[7], ci, in_channels)
    return dict(wg=wg, bg=bg, wt=wt, bt=bt, wp=wp, bp=bp, wo=wo, bo=bo)


if __name__ == "__main__":
    key = jax.random.PRNGKey(0)
    k_x, k_p = jax.random.split(key)

    N, C, H, W = 2, 4, 16, 16
    x = jax.random.normal(k_x, (N, C, H, W), dtype=jnp.float32)
    params = make_params(k_p, C, reduction=2)

    ref = _reference(x, params, use_scale=True, mode='embedded_gaussian')

    # Exact f32 compute path: strict semantic check vs the reference.
    out_f32 = nonlocal_block_2d(x, params, use_scale=True,
                                mode='embedded_gaussian',
                                compute_dtype=jnp.float32)
    out_f32 = jax.block_until_ready(out_f32)
    assert out_f32.shape == (N, C, H, W)
    assert jnp.allclose(out_f32, ref, atol=1e-4, rtol=1e-4), "f32 mismatch"

    # Default fast path: bf16 MXU operands for the attention matmuls,
    # f32 accumulation / softmax / residual (checked at bf16 tolerance).
    out_bf16 = nonlocal_block_2d(x, params, use_scale=True,
                                 mode='embedded_gaussian')
    out_bf16 = jax.block_until_ready(out_bf16)
    assert jnp.allclose(out_bf16, ref, atol=1e-1, rtol=5e-2), "bf16 mismatch"

    # dot_product mode (f32), also checked against the reference.
    ref_dp = _reference(x, params, use_scale=False, mode='dot_product')
    out_dp = nonlocal_block_2d(x, params, use_scale=False, mode='dot_product',
                               compute_dtype=jnp.float32)
    out_dp = jax.block_until_ready(out_dp)
    assert jnp.allclose(out_dp, ref_dp, atol=1e-4, rtol=1e-4), "dot_product mismatch"

    print("KERNEL_OK")
</pallas_src>

<mosaic_0001>
module attributes {stable_mosaic.version = 11 : i64} {
  func.func @_projection_kernel(%arg0: i32, %arg1: i32, %arg2: memref<1x4x256xf32, #tpu.memory_space<vmem>>, %arg3: memref<384x4xf32, #tpu.memory_space<vmem>>, %arg4: memref<384x1xf32, #tpu.memory_space<vmem>>, %arg5: memref<1x128x256xf32, #tpu.memory_space<vmem>>, %arg6: memref<1x128x256xf32, #tpu.memory_space<vmem>>, %arg7: memref<1x128x256xf32, #tpu.memory_space<vmem>>) attributes {dimension_semantics = [#tpu.dimension_semantics<parallel>, #tpu.dimension_semantics<parallel>], iteration_bounds = array<i64: 2, 1>, scalar_prefetch = 0 : i64, scratch_operands = 0 : i64, tpu.core_type = #tpu.core_type<tc>, window_params = [{transform_indices = @transform_0, window_bounds = array<i64: 1, 4, 256>}, {pipeline_mode = #tpu.pipeline_mode<synchronous>, transform_indices = @transform_1, window_bounds = array<i64: 384, 4>}, {pipeline_mode = #tpu.pipeline_mode<synchronous>, transform_indices = @transform_2, window_bounds = array<i64: 384, 1>}, {transform_indices = @transform_3, window_bounds = array<i64: 1, 128, 256>}, {transform_indices = @transform_4, window_bounds = array<i64: 1, 128, 256>}, {transform_indices = @transform_5, window_bounds = array<i64: 1, 128, 256>}]} {
    %c0 = arith.constant 0 : index
    %c0_0 = arith.constant 0 : index
    %0 = vector.load %arg3[%c0, %c0_0] : memref<384x4xf32, #tpu.memory_space<vmem>>, vector<384x4xf32>
    %c0_1 = arith.constant 0 : index
    %c0_2 = arith.constant 0 : index
    %c0_3 = arith.constant 0 : index
    %1 = vector.load %arg2[%c0_1, %c0_2, %c0_3] : memref<1x4x256xf32, #tpu.memory_space<vmem>>, vector<1x4x256xf32>
    %2 = vector.shape_cast %1 : vector<1x4x256xf32> to vector<4x256xf32>
    %cst = arith.constant dense<0.000000e+00> : vector<384x256xf32>
    %3 = tpu.matmul %0, %2, %cst {dimension_numbers = #tpu.dot_dimension_numbers<[1], [0], [0], [1], [0, 0, 1, 1], [], []>} : vector<384x4xf32>, vector<4x256xf32>, vector<384x256xf32> -> vector<384x256xf32>
    %c0_4 = arith.constant 0 : index
    %c0_5 = arith.constant 0 : index
    %4 = vector.load %arg4[%c0_4, %c0_5] : memref<384x1xf32, #tpu.memory_space<vmem>>, vector<384x1xf32>
    %5 = vector.broadcast %4 : vector<384x1xf32> to vector<384x256xf32>
    %6 = arith.addf %3, %5 : vector<384x256xf32>
    %7 = vector.extract_strided_slice %6 {offsets = [0, 0], sizes = [128, 256], strides = [1, 1]} : vector<384x256xf32> to vector<128x256xf32>
    %cst_6 = arith.constant 1.41421354 : f32
    %8 = vector.broadcast %cst_6 : f32 to vector<128x256xf32>
    %9 = arith.mulf %7, %8 : vector<128x256xf32>
    %c0_7 = arith.constant 0 : index
    %c0_8 = arith.constant 0 : index
    %c0_9 = arith.constant 0 : index
    %10 = vector.load %arg5[%c0_7, %c0_8, %c0_9] : memref<1x128x256xf32, #tpu.memory_space<vmem>>, vector<1x128x256xf32>
    %11 = vector.shape_cast %10 : vector<1x128x256xf32> to vector<128x256xf32>
    %12 = vector.shape_cast %9 : vector<128x256xf32> to vector<1x128x256xf32>
    tpu.vector_store %arg5[%c0_7, %c0_8, %c0_9], %12 {strides = array<i32>} : memref<1x128x256xf32, #tpu.memory_space<vmem>>, vector<1x128x256xf32>,
    %13 = vector.extract_strided_slice %6 {offsets = [128, 0], sizes = [128, 256], strides = [1, 1]} : vector<384x256xf32> to vector<128x256xf32>
    %c0_10 = arith.constant 0 : index
    %c0_11 = arith.constant 0 : index
    %c0_12 = arith.constant 0 : index
    %14 = vector.load %arg6[%c0_10, %c0_11, %c0_12] : memref<1x128x256xf32, #tpu.memory_space<vmem>>, vector<1x128x256xf32>
    %15 = vector.shape_cast %14 : vector<1x128x256xf32> to vector<128x256xf32>
    %16 = vector.shape_cast %13 : vector<128x256xf32> to vector<1x128x256xf32>
    tpu.vector_store %arg6[%c0_10, %c0_11, %c0_12], %16 {strides = array<i32>} : memref<1x128x256xf32, #tpu.memory_space<vmem>>, vector<1x128x256xf32>,
    %17 = vector.extract_strided_slice %6 {offsets = [256, 0], sizes = [128, 256], strides = [1, 1]} : vector<384x256xf32> to vector<128x256xf32>
    %c0_13 = arith.constant 0 : index
    %c0_14 = arith.constant 0 : index
    %c0_15 = arith.constant 0 : index
    %18 = vector.load %arg7[%c0_13, %c0_14, %c0_15] : memref<1x128x256xf32, #tpu.memory_space<vmem>>, vector<1x128x256xf32>
    %19 = vector.shape_cast %18 : vector<1x128x256xf32> to vector<128x256xf32>
    %20 = vector.shape_cast %17 : vector<128x256xf32> to vector<1x128x256xf32>
    tpu.vector_store %arg7[%c0_13, %c0_14, %c0_15], %20 {strides = array<i32>} : memref<1x128x256xf32, #tpu.memory_space<vmem>>, vector<1x128x256xf32>,
    return
  }
  func.func @transform_0(%arg0: i32, %arg1: i32) -> (i32, i32, i32) {
    %c0_i32 = arith.constant 0 : i32
    %c0_i32_0 = arith.constant 0 : i32
    return %arg0, %c0_i32, %arg1 : i32, i32, i32
  }
  func.func @transform_1(%arg0: i32, %arg1: i32) -> (i32, i32) {
    %c0_i32 = arith.constant 0 : i32
    %c0_i32_0 = arith.constant 0 : i32
    %c0_i32_1 = arith.constant 0 : i32
    return %c0_i32, %c0_i32_0 : i32, i32
  }
  func.func @transform_2(%arg0: i32, %arg1: i32) -> (i32, i32) {
    %c0_i32 = arith.constant 0 : i32
    %c0_i32_0 = arith.constant 0 : i32
    %c0_i32_1 = arith.constant 0 : i32
    return %c0_i32, %c0_i32_0 : i32, i32
  }
  func.func @transform_3(%arg0: i32, %arg1: i32) -> (i32, i32, i32) {
    %c0_i32 = arith.constant 0 : i32
    %c0_i32_0 = arith.constant 0 : i32
    return %arg0, %c0_i32, %arg1 : i32, i32, i32
  }
  func.func @transform_4(%arg0: i32, %arg1: i32) -> (i32, i32, i32) {
    %c0_i32 = arith.constant 0 : i32
    %c0_i32_0 = arith.constant 0 : i32
    return %arg0, %c0_i32, %arg1 : i32, i32, i32
  }
  func.func @transform_5(%arg0: i32, %arg1: i32) -> (i32, i32, i32) {
    %c0_i32 = arith.constant 0 : i32
    %c0_i32_0 = arith.constant 0 : i32
    return %arg0, %c0_i32, %arg1 : i32, i32, i32
  }
}

</mosaic_0001>

<llo_original>
// kernel: tpu_custom_call.1
$region0: #{tpu_custom_call.1}
  #allocation0 [shape = 'u32[]', space=smem, size = 0x4, offset = 0x4, fixed_abs, tag = 'smem constant byte address 0x4 - core index']
  #allocation1 [shape = 'u32[144,128]{1,0:T(1,128)}', space=vmem, size = 0x12000, scoped, tag = 'internal scratch']
  %s0 = inlined_call_operand.vmem [shape: f32[2,4,256], index: 0, kind: input, shape index: {}]
  %s1 = inlined_call_operand.vmem [shape: f32[384,4], index: 1, kind: input, shape index: {}]
  %s2 = inlined_call_operand.vmem [shape: f32[384,1], index: 2, kind: input, shape index: {}]
  %s3 = inlined_call_operand.hbm [shape: f32[2,128,256], index: 3, kind: output, shape index: {0}]
  %s4 = inlined_call_operand.hbm [shape: f32[2,128,256], index: 4, kind: output, shape index: {1}]
  %s5 = inlined_call_operand.hbm [shape: f32[2,128,256], index: 5, kind: output, shape index: {2}]
  %6 = xla_tuple %s3, %s4, %s5
  %s7 = sld [smem:[#allocation0]]
  $region61: #{tpu_custom_call.1} parent=0
    _
  %s9 = ssub.s32 1, %s7
  %s10 = scalar_select 0, %s9, %s7
  $region1: #{tpu_custom_call.1} parent=0
    #allocation2 [shape = 'u8[262144]{0}', space=vmem, size = 0x40000, scoped, tag = 'output window, operand 0']
    #allocation3 [shape = 's32[2]{0}', space=sflag, size = 0x8, scoped, tag = 'scoped memory for tpu_custom_call.1']
    #allocation4 [shape = 'u8[262144]{0}', space=vmem, size = 0x40000, scoped, tag = 'output window, operand 1']
    #allocation5 [shape = 's32[2]{0}', space=sflag, size = 0x8, scoped, tag = 'scoped memory for tpu_custom_call.1']
    #allocation6 [shape = 'u8[262144]{0}', space=vmem, size = 0x40000, scoped, tag = 'output window, operand 2']
    %11 = vsyncpa [#allocation3], 0
    %s12 = scalar_lea.sflag [#allocation3], 1
    %13 = vsyncpa %s12, 0
    %14 = vsyncpa [#allocation5], 0
    %s15 = scalar_lea.sflag [#allocation5], 1
    %16 = vsyncpa %s15, 0
    loop: start=0, step=1, limit=4
    $region2: #{tpu_custom_call.1} parent=1 // loop_pre_header
      _
    $region3: #{tpu_custom_call.1} parent=1 // loop_header
      %s18 = sphi 0, %s22
      %p19 = scmp.ge.s32.totalorder %s18, 4
      %s25 = sphi 0, %s37
      %s26 = sphi 0, %s33
      %s27 = sphi 0, %s25
      %s28 = sphi 0, %s26
      %s29 = sphi 0, %s27
      %s30 = sphi 0, %s28
      %s42 = sphi 0, %s44
      %s45 = sphi 0, %s42
      %s46 = sphi 0, %s45
      %s62 = sphi 0, %s46
      %s66 = sphi 0, %s66
      %s68 = sphi 0, %s66
      %s69 = sphi 0, %s68
      %s83 = sphi 0, %s69
      %s87 = sphi 0, %s87
      %s89 = sphi 0, %s87
      %s90 = sphi 0, %s89
      %s104 = sphi 0, %s90
      %s112 = sphi 0, %s114
      %s115 = sphi 0, %s112
      %s116 = sphi 0, %s115
      %s132 = sphi 0, %s116
      %s140 = sphi 0, %s142
      %s143 = sphi 0, %s140
      %s144 = sphi 0, %s143
      %s160 = sphi 0, %s144
      %s168 = sphi 0, %s170
      %s171 = sphi 0, %s168
      %s172 = sphi 0, %s171
      %s188 = sphi 0, %s172
    $region4: #{tpu_custom_call.1} parent=1 // loop_header_branch
      %21 = sbr.rel (%p19) target = $region8
    $region5: #{tpu_custom_call.1} parent=1 // loop_body
      %s23 = ssub.s32 %s18, 1
      %s24 = ssub.s32 %s18, 2
      %s31 = sadd.s32 1, %s26
      %p32 = scmp.ge.s32.totalorder %s31, 1
      %s33 = scalar_select %p32, 0, %s31
      %s34 = sadd.s32 1, %s25
      %s35 = scalar_select %p32, %s34, %s25
      %p36 = scmp.ge.s32.totalorder %s35, 2
      %s37 = scalar_select %p36, 0, %s35
      %s38 = ssub.s32 %s25, %s37
      %s39 = ssub.s32 %s26, %s33
      %s40 = sor.u32 %s38, %s39
      %p41 = scmp.eq.s32.totalorder %s40, 0
      %s43 = sadd.s32 %s42, 1
      %s44 = scalar_select %p41, %s42, %s43
      %p47 = pneg %p41
      %p48 = scmp.eq.s32.totalorder %s18, 1
      %p49 = por %p47, %p48
      %p50 = scmp.ne.s32.totalorder %s42, %s45
      %p51 = scmp.eq.s32.totalorder %s18, 0
      %p52 = por %p50, %p51
      %p53 = scmp.ne.s32.totalorder %s42, %s45
      %p54 = scmp.eq.s32.totalorder %s23, 1
      %p55 = por %p53, %p54
      %p56 = scmp.ne.s32.totalorder %s45, %s46
      %p57 = scmp.eq.s32.totalorder %s23, 0
      %p58 = por %p56, %p57
      %p59 = scmp.ne.s32.totalorder %s45, %s46
      %p60 = scmp.eq.s32.totalorder %s24, 1
      %p61 = por %p59, %p60
      %p63 = scmp.ne.s32.totalorder %s46, %s62
      %p64 = scmp.eq.s32.totalorder %s24, 0
      %p65 = por %p63, %p64
      %s67 = sadd.s32 %s66, 1
      %p70 = scmp.eq.s32.totalorder %s18, 1
      %p71 = scmp.ne.s32.totalorder %s66, %s68
      %p72 = scmp.eq.s32.totalorder %s18, 0
      %p73 = por %p71, %p72
      %p74 = scmp.ne.s32.totalorder %s66, %s68
      %p75 = scmp.eq.s32.totalorder %s23, 1
      %p76 = por %p74, %p75
      %p77 = scmp.ne.s32.totalorder %s68, %s69
      %p78 = scmp.eq.s32.totalorder %s23, 0
      %p79 = por %p77, %p78
      %p80 = scmp.ne.s32.totalorder %s68, %s69
      %p81 = scmp.eq.s32.totalorder %s24, 1
      %p82 = por %p80, %p81
      %p84 = scmp.ne.s32.totalorder %s69, %s83
      %p85 = scmp.eq.s32.totalorder %s24, 0
      %p86 = por %p84, %p85
      %s88 = sadd.s32 %s87, 1
      %p91 = scmp.eq.s32.totalorder %s18, 1
      %p92 = scmp.ne.s32.totalorder %s87, %s89
      %p93 = scmp.eq.s32.totalorder %s18, 0
      %p94 = por %p92, %p93
      %p95 = scmp.ne.s32.totalorder %s87, %s89
      %p96 = scmp.eq.s32.totalorder %s23, 1
      %p97 = por %p95, %p96
      %p98 = scmp.ne.s32.totalorder %s89, %s90
      %p99 = scmp.eq.s32.totalorder %s23, 0
      %p100 = por %p98, %p99
      %p101 = scmp.ne.s32.totalorder %s89, %s90
      %p102 = scmp.eq.s32.totalorder %s24, 1
      %p103 = por %p101, %p102
      %p105 = scmp.ne.s32.totalorder %s90, %s104
      %p106 = scmp.eq.s32.totalorder %s24, 0
      %p107 = por %p105, %p106
      %s108 = ssub.s32 %s25, %s37
      %s109 = ssub.s32 %s26, %s33
      %s110 = sor.u32 %s108, %s109
      %p111 = scmp.eq.s32.totalorder %s110, 0
      %s113 = sadd.s32 %s112, 1
      %s114 = scalar_select %p111, %s112, %s113
      %p117 = pneg %p111
      %p118 = scmp.eq.s32.totalorder %s18, 1
      %p119 = por %p117, %p118
      %p120 = scmp.ne.s32.totalorder %s112, %s115
      %p121 = scmp.eq.s32.totalorder %s18, 0
      %p122 = por %p120, %p121
      %p123 = scmp.ne.s32.totalorder %s112, %s115
      %p124 = scmp.eq.s32.totalorder %s23, 1
      %p125 = por %p123, %p124
      %p126 = scmp.ne.s32.totalorder %s115, %s116
      %p127 = scmp.eq.s32.totalorder %s23, 0
      %p128 = por %p126, %p127
      %p129 = scmp.ne.s32.totalorder %s115, %s116
      %p130 = scmp.eq.s32.totalorder %s24, 1
      %p131 = por %p129, %p130
      %p133 = scmp.ne.s32.totalorder %s116, %s132
      %p134 = scmp.eq.s32.totalorder %s24, 0
      %p135 = por %p133, %p134
      %s136 = ssub.s32 %s25, %s37
      %s137 = ssub.s32 %s26, %s33
      %s138 = sor.u32 %s136, %s137
      %p139 = scmp.eq.s32.totalorder %s138, 0
      %s141 = sadd.s32 %s140, 1
      %s142 = scalar_select %p139, %s140, %s141
      %p145 = pneg %p139
      %p146 = scmp.eq.s32.totalorder %s18, 1
      %p147 = por %p145, %p146
      %p148 = scmp.ne.s32.totalorder %s140, %s143
      %p149 = scmp.eq.s32.totalorder %s18, 0
      %p150 = por %p148, %p149
      %p151 = scmp.ne.s32.totalorder %s140, %s143
      %p152 = scmp.eq.s32.totalorder %s23, 1
      %p153 = por %p151, %p152
      %p154 = scmp.ne.s32.totalorder %s143, %s144
      %p155 = scmp.eq.s32.totalorder %s23, 0
      %p156 = por %p154, %p155
      %p157 = scmp.ne.s32.totalorder %s143, %s144
      %p158 = scmp.eq.s32.totalorder %s24, 1
      %p159 = por %p157, %p158
      %p161 = scmp.ne.s32.totalorder %s144, %s160
      %p162 = scmp.eq.s32.totalorder %s24, 0
      %p163 = por %p161, %p162
      %s164 = ssub.s32 %s25, %s37
      %s165 = ssub.s32 %s26, %s33
      %s166 = sor.u32 %s164, %s165
      %p167 = scmp.eq.s32.totalorder %s166, 0
      %s169 = sadd.s32 %s168, 1
      %s170 = scalar_select %p167, %s168, %s169
      %p173 = pneg %p167
      %p174 = scmp.eq.s32.totalorder %s18, 1
      %p175 = por %p173, %p174
      %p176 = scmp.ne.s32.totalorder %s168, %s171
      %p177 = scmp.eq.s32.totalorder %s18, 0
      %p178 = por %p176, %p177
      %p179 = scmp.ne.s32.totalorder %s168, %s171
      %p180 = scmp.eq.s32.totalorder %s23, 1
      %p181 = por %p179, %p180
      %p182 = scmp.ne.s32.totalorder %s171, %s172
      %p183 = scmp.eq.s32.totalorder %s23, 0
      %p184 = por %p182, %p183
      %p185 = scmp.ne.s32.totalorder %s171, %s172
      %p186 = scmp.eq.s32.totalorder %s24, 1
      %p187 = por %p185, %p186
      %p189 = scmp.ne.s32.totalorder %s172, %s188
      %p190 = scmp.eq.s32.totalorder %s24, 0
      %p191 = por %p189, %p190
      %p192 = scmp.le.s32.totalorder 1, %s18
      %p193 = scmp.lt.s32.totalorder %s18, 3
      %p194 = pnand %p192, %p193
      %p195 = pneg %p194
      // Predicated region
      $region9: #{tpu_custom_call.1} parent=5 // pred_check
        _
      $region10: #{tpu_custom_call.1} parent=5 // pred_check_branch
        %197 = sbr.rel (%p194) target = $region12
      $region11: #{tpu_custom_call.1} parent=5 // pred_region
        %s198 = ssub.s32 %s18, 1
        // Predicated region
        $region13: #{tpu_custom_call.1} parent=11 // pred_check
          %p199 = pneg %p79
        $region14: #{tpu_custom_call.1} parent=11 // pred_check_branch
          %201 = sbr.rel (%p199) target = $region16
        $region15: #{tpu_custom_call.1} parent=11 // pred_region
          _
        $region16: #{tpu_custom_call.1} parent=11 // pred_fallthru
          _
        // Predicated region
        $region17: #{tpu_custom_call.1} parent=11 // pred_check
          %p202 = pneg %p100
        $region18: #{tpu_custom_call.1} parent=11 // pred_check_branch
          %204 = sbr.rel (%p202) target = $region20
        $region19: #{tpu_custom_call.1} parent=11 // pred_region
          _
        $region20: #{tpu_custom_call.1} parent=11 // pred_fallthru
          _
      $region12: #{tpu_custom_call.1} parent=5 // pred_fallthru
        _
      %p205 = scmp.lt.s32.totalorder %s18, 2
      // Predicated region
      $region21: #{tpu_custom_call.1} parent=5 // pred_check
        %p206 = pneg %p205
      $region22: #{tpu_custom_call.1} parent=5 // pred_check_branch
        %208 = sbr.rel (%p206) target = $region24
      $region23: #{tpu_custom_call.1} parent=5 // pred_region
        // Predicated region
        $region25: #{tpu_custom_call.1} parent=23 // pred_check
          %p209 = pneg %p52
        $region26: #{tpu_custom_call.1} parent=23 // pred_check_branch
          %211 = sbr.rel (%p209) target = $region28
        $region27: #{tpu_custom_call.1} parent=23 // pred_region
          %s212 = smul.u32 2, %s26
          %p213 = scmp.lt.s32.totalorder %s25, 1
          %s214 = scalar_select %p213, %s25, 1
          %p215 = scmp.lt.s32.totalorder %s212, 1
          %s216 = scalar_select %p215, %s212, 1
          %s217 = smul.addr %s214, 2
          %s218 = sadd.s32 %s216, %s217
          %s219 = smul.addr %s218, 4
          %s220 = scalar_lea.vmem %s0, %s219
          %s221 = smul.u32 2, %s26
        $region28: #{tpu_custom_call.1} parent=23 // pred_fallthru
          _
      $region24: #{tpu_custom_call.1} parent=5 // pred_fallthru
        _
      %p222 = scmp.le.s32.totalorder 1, %s18
      %p223 = scmp.lt.s32.totalorder %s18, 3
      %p224 = pnand %p222, %p223
      %p225 = pneg %p224
      // Predicated region
      $region29: #{tpu_custom_call.1} parent=5 // pred_check
        _
      $region30: #{tpu_custom_call.1} parent=5 // pred_check_branch
        %227 = sbr.rel (%p224) target = $region32
      $region31: #{tpu_custom_call.1} parent=5 // pred_region
        %s228 = ssub.s32 %s18, 1
        %s229 = smul.u32 2, %s28
        %p230 = scmp.lt.s32.totalorder %s27, 1
        %s231 = scalar_select %p230, %s27, 1
        %p232 = scmp.lt.s32.totalorder %s229, 1
        %s233 = scalar_select %p232, %s229, 1
        %s234 = smul.addr %s231, 2
        %s235 = sadd.s32 %s233, %s234
        %s236 = smul.addr %s235, 4
        %s237 = scalar_lea.vmem %s0, %s236
        %p238 = pneg %p58
        %p239 = pneg %p55
        %p240 = pneg %p79
        %p241 = pneg %p76
        %p242 = pneg %p100
        %p243 = pneg %p97
        %p244 = pneg %p128
        %p245 = pneg %p125
        %s246 = sand.u32 %s115, 1
        %s247 = scalar_lea.sflag [#allocation3], %s246
        %s248 = sand.u32 %s115, 1
        %s249 = smul.addr %s248, 256
        %s250 = scalar_lea.vmem [#allocation2], %s249
        %p251 = pneg %p156
        %p252 = pneg %p153
        %s253 = sand.u32 %s23, 1
        %s254 = scalar_lea.sflag [#allocation5], %s253
        %s255 = sand.u32 %s143, 1
        %s256 = smul.addr %s255, 256
        %s257 = scalar_lea.vmem [#allocation4], %s256
        %p258 = pneg %p184
        %p259 = pneg %p181
        %s260 = sand.u32 %s23, 1
        %s261 = scalar_lea.sflag [#allocation5], %s260
        %s262 = sand.u32 %s171, 1
        %s263 = smul.addr %s262, 256
        %s264 = scalar_lea.vmem [#allocation6], %s263
        %s265 = smul.u32 2, %s28
        %p266 = scmp.lt.s32.totalorder %s27, 1
        %s267 = scalar_select %p266, %s27, 1
        %p268 = scmp.lt.s32.totalorder %s265, 1
        %s269 = scalar_select %p268, %s265, 1
        %s270 = smul.addr %s267, 2
        %s271 = sadd.s32 %s269, %s270
        %s272 = smul.addr %s271, 4
        %s273 = scalar_lea.vmem %s0, %s272
        %s274 = smul.u32 2, %s28
        %s275 = smul.u32 2, %s28
        %s276 = smul.u32 2, %s28
        %s277 = smul.u32 2, %s28
        %v278 = vld [vmem:[%s1] sm:$0xff]
        %v279 = vld [vmem:[%s1 + $0x8] sm:$0xff]
        %v280 = vld [vmem:[%s1 + $0x10] sm:$0xff]
        %v281 = vld [vmem:[%s1 + $0x18] sm:$0xff]
        %v282 = vld [vmem:[%s1 + $0x20] sm:$0xff]
        %v283 = vld [vmem:[%s1 + $0x28] sm:$0xff]
        %v284 = vld [vmem:[%s1 + $0x30] sm:$0xff]
        %v285 = vld [vmem:[%s1 + $0x38] sm:$0xff]
        %v286 = vld [vmem:[%s1 + $0x40] sm:$0xff]
        %v287 = vld [vmem:[%s1 + $0x48] sm:$0xff]
        %v288 = vld [vmem:[%s1 + $0x50] sm:$0xff]
        %v289 = vld [vmem:[%s1 + $0x58] sm:$0xff]
        %v290 = vld [vmem:[%s1 + $0x60] sm:$0xff]
        %v291 = vld [vmem:[%s1 + $0x68] sm:$0xff]
        %v292 = vld [vmem:[%s1 + $0x70] sm:$0xff]
        %v293 = vld [vmem:[%s1 + $0x78] sm:$0xff]
        %v294 = vld [vmem:[%s1 + $0x80] sm:$0xff]
        %v295 = vld [vmem:[%s1 + $0x88] sm:$0xff]
        %v296 = vld [vmem:[%s1 + $0x90] sm:$0xff]
        %v297 = vld [vmem:[%s1 + $0x98] sm:$0xff]
        %v298 = vld [vmem:[%s1 + $0xa0] sm:$0xff]
        %v299 = vld [vmem:[%s1 + $0xa8] sm:$0xff]
        %v300 = vld [vmem:[%s1 + $0xb0] sm:$0xff]
        %v301 = vld [vmem:[%s1 + $0xb8] sm:$0xff]
        %v302 = vld [vmem:[%s1 + $0xc0] sm:$0xff]
        %v303 = vld [vmem:[%s1 + $0xc8] sm:$0xff]
        %v304 = vld [vmem:[%s1 + $0xd0] sm:$0xff]
        %v305 = vld [vmem:[%s1 + $0xd8] sm:$0xff]
        %v306 = vld [vmem:[%s1 + $0xe0] sm:$0xff]
        %v307 = vld [vmem:[%s1 + $0xe8] sm:$0xff]
        %v308 = vld [vmem:[%s1 + $0xf0] sm:$0xff]
        %v309 = vld [vmem:[%s1 + $0xf8] sm:$0xff]
        %v310 = vld [vmem:[%s1 + $0x100] sm:$0xff]
        %v311 = vld [vmem:[%s1 + $0x108] sm:$0xff]
        %v312 = vld [vmem:[%s1 + $0x110] sm:$0xff]
        %v313 = vld [vmem:[%s1 + $0x118] sm:$0xff]
        %v314 = vld [vmem:[%s1 + $0x120] sm:$0xff]
        %v315 = vld [vmem:[%s1 + $0x128] sm:$0xff]
        %v316 = vld [vmem:[%s1 + $0x130] sm:$0xff]
        %v317 = vld [vmem:[%s1 + $0x138] sm:$0xff]
        %v318 = vld [vmem:[%s1 + $0x140] sm:$0xff]
        %v319 = vld [vmem:[%s1 + $0x148] sm:$0xff]
        %v320 = vld [vmem:[%s1 + $0x150] sm:$0xff]
        %v321 = vld [vmem:[%s1 + $0x158] sm:$0xff]
        %v322 = vld [vmem:[%s1 + $0x160] sm:$0xff]
        %v323 = vld [vmem:[%s1 + $0x168] sm:$0xff]
        %v324 = vld [vmem:[%s1 + $0x170] sm:$0xff]
        %v325 = vld [vmem:[%s1 + $0x178] sm:$0xff]
        %v326 = vld [vmem:[%s273] sm:$0xff]
        %v327 = vld [vmem:[%s2] sm:$0xff]
        %v328 = vld [vmem:[%s2 + $0x8] sm:$0xff]
        %v329 = vld [vmem:[%s2 + $0x10] sm:$0xff]
        %v330 = vld [vmem:[%s2 + $0x18] sm:$0xff]
        %v331 = vld [vmem:[%s2 + $0x20] sm:$0xff]
        %v332 = vld [vmem:[%s2 + $0x28] sm:$0xff]
        %v333 = vld [vmem:[%s2 + $0x30] sm:$0xff]
        %v334 = vld [vmem:[%s2 + $0x38] sm:$0xff]
        %v335 = vld [vmem:[%s2 + $0x40] sm:$0xff]
        %v336 = vld [vmem:[%s2 + $0x48] sm:$0xff]
        %v337 = vld [vmem:[%s2 + $0x50] sm:$0xff]
        %v338 = vld [vmem:[%s2 + $0x58] sm:$0xff]
        %v339 = vld [vmem:[%s2 + $0x60] sm:$0xff]
        %v340 = vld [vmem:[%s2 + $0x68] sm:$0xff]
        %v341 = vld [vmem:[%s2 + $0x70] sm:$0xff]
        %v342 = vld [vmem:[%s2 + $0x78] sm:$0xff]
        %v343 = vld [vmem:[%s2 + $0x80] sm:$0xff]
        %v344 = vld [vmem:[%s2 + $0x88] sm:$0xff]
        %v345 = vld [vmem:[%s2 + $0x90] sm:$0xff]
        %v346 = vld [vmem:[%s2 + $0x98] sm:$0xff]
        %v347 = vld [vmem:[%s2 + $0xa0] sm:$0xff]
        %v348 = vld [vmem:[%s2 + $0xa8] sm:$0xff]
        %v349 = vld [vmem:[%s2 + $0xb0] sm:$0xff]
        %v350 = vld [vmem:[%s2 + $0xb8] sm:$0xff]
        %v351 = vld [vmem:[%s2 + $0xc0] sm:$0xff]
        %v352 = vld [vmem:[%s2 + $0xc8] sm:$0xff]
        %v353 = vld [vmem:[%s2 + $0xd0] sm:$0xff]
        %v354 = vld [vmem:[%s2 + $0xd8] sm:$0xff]
        %v355 = vld [vmem:[%s2 + $0xe0] sm:$0xff]
        %v356 = vld [vmem:[%s2 + $0xe8] sm:$0xff]
        %v357 = vld [vmem:[%s2 + $0xf0] sm:$0xff]
        %v358 = vld [vmem:[%s2 + $0xf8] sm:$0xff]
        %v359 = vld [vmem:[%s2 + $0x100] sm:$0xff]
        %v360 = vld [vmem:[%s2 + $0x108] sm:$0xff]
        %v361 = vld [vmem:[%s2 + $0x110] sm:$0xff]
        %v362 = vld [vmem:[%s2 + $0x118] sm:$0xff]
        %v363 = vld [vmem:[%s2 + $0x120] sm:$0xff]
        %v364 = vld [vmem:[%s2 + $0x128] sm:$0xff]
        %v365 = vld [vmem:[%s2 + $0x130] sm:$0xff]
        %v366 = vld [vmem:[%s2 + $0x138] sm:$0xff]
        %v367 = vld [vmem:[%s2 + $0x140] sm:$0xff]
        %v368 = vld [vmem:[%s2 + $0x148] sm:$0xff]
        %v369 = vld [vmem:[%s2 + $0x150] sm:$0xff]
        %v370 = vld [vmem:[%s2 + $0x158] sm:$0xff]
        %v371 = vld [vmem:[%s2 + $0x160] sm:$0xff]
        %v372 = vld [vmem:[%s2 + $0x168] sm:$0xff]
        %v373 = vld [vmem:[%s2 + $0x170] sm:$0xff]
        %v374 = vld [vmem:[%s2 + $0x178] sm:$0xff]
        %376 = vset.pattern.permute.xlu0 0
        %377 = vperm.xlu0 %376, %v327
        %v378 = vpop.permute.xlu0 %377
        %381 = vset.pattern.permute.xlu0 0
        %382 = vperm.xlu0 %381, %v328
        %v383 = vpop.permute.xlu0 %382
        %386 = vset.pattern.permute.xlu0 0
        %387 = vperm.xlu0 %386, %v329
        %v388 = vpop.permute.xlu0 %387
        %391 = vset.pattern.permute.xlu0 0
        %392 = vperm.xlu0 %391, %v330
        %v393 = vpop.permute.xlu0 %392
        %396 = vset.pattern.permute.xlu0 0
        %397 = vperm.xlu0 %396, %v331
        %v398 = vpop.permute.xlu0 %397
        %401 = vset.pattern.permute.xlu0 0
        %402 = vperm.xlu0 %401, %v332
        %v403 = vpop.permute.xlu0 %402
        %406 = vset.pattern.permute.xlu0 0
        %407 = vperm.xlu0 %406, %v333
        %v408 = vpop.permute.xlu0 %407
        %411 = vset.pattern.permute.xlu0 0
        %412 = vperm.xlu0 %411, %v334
        %v413 = vpop.permute.xlu0 %412
        %416 = vset.pattern.permute.xlu0 0
        %417 = vperm.xlu0 %416, %v335
        %v418 = vpop.permute.xlu0 %417
        %421 = vset.pattern.permute.xlu0 0
        %422 = vperm.xlu0 %421, %v336
        %v423 = vpop.permute.xlu0 %422
        %426 = vset.pattern.permute.xlu0 0
        %427 = vperm.xlu0 %426, %v337
        %v428 = vpop.permute.xlu0 %427
        %431 = vset.pattern.permute.xlu0 0
        %432 = vperm.xlu0 %431, %v338
        %v433 = vpop.permute.xlu0 %432
        %436 = vset.pattern.permute.xlu0 0
        %437 = vperm.xlu0 %436, %v339
        %v438 = vpop.permute.xlu0 %437
        %441 = vset.pattern.permute.xlu0 0
        %442 = vperm.xlu0 %441, %v340
        %v443 = vpop.permute.xlu0 %442
        %446 = vset.pattern.permute.xlu0 0
        %447 = vperm.xlu0 %446, %v341
        %v448 = vpop.permute.xlu0 %447
        %451 = vset.pattern.permute.xlu0 0
        %452 = vperm.xlu0 %451, %v342
        %v453 = vpop.permute.xlu0 %452
        %456 = vset.pattern.permute.xlu0 0
        %457 = vperm.xlu0 %456, %v343
        %v458 = vpop.permute.xlu0 %457
        %461 = vset.pattern.permute.xlu0 0
        %462 = vperm.xlu0 %461, %v344
        %v463 = vpop.permute.xlu0 %462
        %466 = vset.pattern.permute.xlu0 0
        %467 = vperm.xlu0 %466, %v345
        %v468 = vpop.permute.xlu0 %467
        %471 = vset.pattern.permute.xlu0 0
        %472 = vperm.xlu0 %471, %v346
        %v473 = vpop.permute.xlu0 %472
        %476 = vset.pattern.permute.xlu0 0
        %477 = vperm.xlu0 %476, %v347
        %v478 = vpop.permute.xlu0 %477
        %481 = vset.pattern.permute.xlu0 0
        %482 = vperm.xlu0 %481, %v348
        %v483 = vpop.permute.xlu0 %482
        %486 = vset.pattern.permute.xlu0 0
        %487 = vperm.xlu0 %486, %v349
        %v488 = vpop.permute.xlu0 %487
        %491 = vset.pattern.permute.xlu0 0
        %492 = vperm.xlu0 %491, %v350
        %v493 = vpop.permute.xlu0 %492
        %496 = vset.pattern.permute.xlu0 0
        %497 = vperm.xlu0 %496, %v351
        %v498 = vpop.permute.xlu0 %497
        %501 = vset.pattern.permute.xlu0 0
        %502 = vperm.xlu0 %501, %v352
        %v503 = vpop.permute.xlu0 %502
        %506 = vset.pattern.permute.xlu0 0
        %507 = vperm.xlu0 %506, %v353
        %v508 = vpop.permute.xlu0 %507
        %511 = vset.pattern.permute.xlu0 0
        %512 = vperm.xlu0 %511, %v354
        %v513 = vpop.permute.xlu0 %512
        %516 = vset.pattern.permute.xlu0 0
        %517 = vperm.xlu0 %516, %v355
        %v518 = vpop.permute.xlu0 %517
        %521 = vset.pattern.permute.xlu0 0
        %522 = vperm.xlu0 %521, %v356
        %v523 = vpop.permute.xlu0 %522
        %526 = vset.pattern.permute.xlu0 0
        %527 = vperm.xlu0 %526, %v357
        %v528 = vpop.permute.xlu0 %527
        %531 = vset.pattern.permute.xlu0 0
        %532 = vperm.xlu0 %531, %v358
        %v533 = vpop.permute.xlu0 %532
        %536 = vset.pattern.permute.xlu0 0
        %537 = vperm.xlu0 %536, %v359
        %v538 = vpop.permute.xlu0 %537
        %541 = vset.pattern.permute.xlu0 0
        %542 = vperm.xlu0 %541, %v360
        %v543 = vpop.permute.xlu0 %542
        %546 = vset.pattern.permute.xlu0 0
        %547 = vperm.xlu0 %546, %v361
        %v548 = vpop.permute.xlu0 %547
        %551 = vset.pattern.permute.xlu0 0
        %552 = vperm.xlu0 %551, %v362
        %v553 = vpop.permute.xlu0 %552
        %556 = vset.pattern.permute.xlu0 0
        %557 = vperm.xlu0 %556, %v363
        %v558 = vpop.permute.xlu0 %557
        %561 = vset.pattern.permute.xlu0 0
        %562 = vperm.xlu0 %561, %v364
        %v563 = vpop.permute.xlu0 %562
        %566 = vset.pattern.permute.xlu0 0
        %567 = vperm.xlu0 %566, %v365
        %v568 = vpop.permute.xlu0 %567
        %571 = vset.pattern.permute.xlu0 0
        %572 = vperm.xlu0 %571, %v366
        %v573 = vpop.permute.xlu0 %572
        %576 = vset.pattern.permute.xlu0 0
        %577 = vperm.xlu0 %576, %v367
        %v578 = vpop.permute.xlu0 %577
        %581 = vset.pattern.permute.xlu0 0
        %582 = vperm.xlu0 %581, %v368
        %v583 = vpop.permute.xlu0 %582
        %586 = vset.pattern.permute.xlu0 0
        %587 = vperm.xlu0 %586, %v369
        %v588 = vpop.permute.xlu0 %587
        %591 = vset.pattern.permute.xlu0 0
        %592 = vperm.xlu0 %591, %v370
        %v593 = vpop.permute.xlu0 %592
        %596 = vset.pattern.permute.xlu0 0
        %597 = vperm.xlu0 %596, %v371
        %v598 = vpop.permute.xlu0 %597
        %601 = vset.pattern.permute.xlu0 0
        %602 = vperm.xlu0 %601, %v372
        %v603 = vpop.permute.xlu0 %602
        %606 = vset.pattern.permute.xlu0 0
        %607 = vperm.xlu0 %606, %v373
        %v608 = vpop.permute.xlu0 %607
        %611 = vset.pattern.permute.xlu0 0
        %612 = vperm.xlu0 %611, %v374
        %v613 = vpop.permute.xlu0 %612
        %v616 = vcombine.high %v326, %v326
        %vm617 = vcmask 31744
        %v619 = vsel %vm617, %v278, 0
        %v622 = vsel %vm617, %v279, 0
        %v625 = vsel %vm617, %v280, 0
        %v628 = vsel %vm617, %v281, 0
        %v631 = vsel %vm617, %v282, 0
        %v634 = vsel %vm617, %v283, 0
        %v637 = vsel %vm617, %v284, 0
        %v640 = vsel %vm617, %v285, 0
        %v643 = vsel %vm617, %v286, 0
        %v646 = vsel %vm617, %v287, 0
        %v649 = vsel %vm617, %v288, 0
        %v652 = vsel %vm617, %v289, 0
        %v655 = vsel %vm617, %v290, 0
        %v658 = vsel %vm617, %v291, 0
        %v661 = vsel %vm617, %v292, 0
        %v664 = vsel %vm617, %v293, 0
        %v667 = vsel %vm617, %v294, 0
        %v670 = vsel %vm617, %v295, 0
        %v673 = vsel %vm617, %v296, 0
        %v676 = vsel %vm617, %v297, 0
        %v679 = vsel %vm617, %v298, 0
        %v682 = vsel %vm617, %v299, 0
        %v685 = vsel %vm617, %v300, 0
        %v688 = vsel %vm617, %v301, 0
        %v691 = vsel %vm617, %v302, 0
        %v694 = vsel %vm617, %v303, 0
        %v697 = vsel %vm617, %v304, 0
        %v700 = vsel %vm617, %v305, 0
        %v703 = vsel %vm617, %v306, 0
        %v706 = vsel %vm617, %v307, 0
        %v709 = vsel %vm617, %v308, 0
        %v712 = vsel %vm617, %v309, 0
        %v715 = vsel %vm617, %v310, 0
        %v718 = vsel %vm617, %v311, 0
        %v721 = vsel %vm617, %v312, 0
        %v724 = vsel %vm617, %v313, 0
        %v727 = vsel %vm617, %v314, 0
        %v730 = vsel %vm617, %v315, 0
        %v733 = vsel %vm617, %v316, 0
        %v736 = vsel %vm617, %v317, 0
        %v739 = vsel %vm617, %v318, 0
        %v742 = vsel %vm617, %v319, 0
        %v745 = vsel %vm617, %v320, 0
        %v748 = vsel %vm617, %v321, 0
        %v751 = vsel %vm617, %v322, 0
        %v754 = vsel %vm617, %v323, 0
        %v757 = vsel %vm617, %v324, 0
        %v760 = vsel %vm617, %v325, 0
        %vm762 = vcmask 1043456
        %v763 = vsel %vm762, %v326, 0
        %v765 = vsel %vm762, %v616, 0
        %767 = vmatprep.subr.mxu0 0.0
        %768 = vmatpush1.msra.mxu0 0.0
        %769 = vmatprep.subr.mxu0 0.0
        %770 = vmatpush1.msra.mxu0 0.0
        %771 = vmatprep.subr.mxu0 0.0
        %772 = vmatpush1.msra.mxu0 0.0
        %773 = vmatprep.subr.mxu0 0.0
        %774 = vmatpush1.msra.mxu0 0.0
        %775 = vmatprep.subr.mxu0 0.0
        %776 = vmatpush1.msra.mxu0 0.0
        %777 = vmatprep.subr.mxu0 0.0
        %778 = vmatpush1.msra.mxu0 0.0
        %779 = vmatprep.subr.mxu0 0.0
        %780 = vmatpush1.msra.mxu0 0.0
        %781 = vmatprep.subr.mxu0 0.0
        %782 = vmatpush1.msra.mxu0 0.0
        %783 = vmatprep.subr.mxu0 0.0
        %784 = vmatpush1.msra.mxu0 0.0
        %785 = vmatprep.subr.mxu0 0.0
        %786 = vmatpush1.msra.mxu0 0.0
        %787 = vmatprep.subr.mxu0 0.0
        %788 = vmatpush1.msra.mxu0 0.0
        %789 = vmatprep.subr.mxu0 0.0
        %790 = vmatpush1.msra.mxu0 0.0
        %791 = vmatprep.subr.mxu0 0.0
        %792 = vmatpush1.msra.mxu0 0.0
        %793 = vmatprep.subr.mxu0 0.0
        %794 = vmatpush1.msra.mxu0 0.0
        %795 = vmatprep.subr.mxu0 0.0
        %796 = vmatpush1.msra.mxu0 0.0
        %797 = vmatprep.subr.mxu0 %v765
        %798 = vmatpush1.msra.mxu0 %v763
        %799 = vmatprep.subr.mxu0 0.0
        %800 = vmatpush2.msra.mxu0 0.0
        %801 = vmatprep.subr.mxu0 0.0
        %802 = vmatpush2.msra.mxu0 0.0
        %803 = vmatprep.subr.mxu0 0.0
        %804 = vmatpush2.msra.mxu0 0.0
        %805 = vmatprep.subr.mxu0 0.0
        %806 = vmatpush2.msra.mxu0 0.0
        %807 = vmatprep.subr.mxu0 0.0
        %808 = vmatpush2.msra.mxu0 0.0
        %809 = vmatprep.subr.mxu0 0.0
        %810 = vmatpush2.msra.mxu0 0.0
        %811 = vmatprep.subr.mxu0 0.0
        %812 = vmatpush2.msra.mxu0 0.0
        %813 = vmatprep.subr.mxu0 0.0
        %814 = vmatpush2.msra.mxu0 0.0
        %815 = vmatprep.subr.mxu0 0.0
        %816 = vmatpush2.msra.mxu0 0.0
        %817 = vmatprep.subr.mxu0 0.0
        %818 = vmatpush2.msra.mxu0 0.0
        %819 = vmatprep.subr.mxu0 0.0
        %820 = vmatpush2.msra.mxu0 0.0
        %821 = vmatprep.subr.mxu0 0.0
        %822 = vmatpush2.msra.mxu0 0.0
        %823 = vmatprep.subr.mxu0 0.0
        %824 = vmatpush2.msra.mxu0 0.0
        %825 = vmatprep.subr.mxu0 0.0
        %826 = vmatpush2.msra.mxu0 0.0
        %827 = vmatprep.subr.mxu0 0.0
        %828 = vmatpush2.msra.mxu0 0.0
        %829 = vmatprep.subr.mxu0 0.0
        %830 = vmatpush2.msra.mxu0 0.0
        %831 = vmatprep.mubr.f32.mxu0 0.0
        %832 = vmatmul.mubr.f32.gmra.mxu0 %v619
        %v833 = vpop.f32.mrf.mxu0
        %v834 = vadd.f32 %v378, %v833
        %v835 = vpop.f32.mrf.mxu0
        %v836 = vadd.f32 %v378, %v835
        %837 = vmatprep.mubr.f32.mxu0 0.0
        %838 = vmatmul.mubr.f32.gmra.mxu0 %v622
        %v839 = vpop.f32.mrf.mxu0
        %v840 = vadd.f32 %v383, %v839
        %v841 = vpop.f32.mrf.mxu0
        %v842 = vadd.f32 %v383, %v841
        %843 = vmatprep.mubr.f32.mxu0 0.0
        %844 = vmatmul.mubr.f32.gmra.mxu0 %v625
        %v845 = vpop.f32.mrf.mxu0
        %v846 = vadd.f32 %v388, %v845
        %v847 = vpop.f32.mrf.mxu0
        %v848 = vadd.f32 %v388, %v847
        %849 = vmatprep.mubr.f32.mxu0 0.0
        %850 = vmatmul.mubr.f32.gmra.mxu0 %v628
        %v851 = vpop.f32.mrf.mxu0
        %v852 = vadd.f32 %v393, %v851
        %v853 = vpop.f32.mrf.mxu0
        %v854 = vadd.f32 %v393, %v853
        %855 = vmatprep.mubr.f32.mxu0 0.0
        %856 = vmatmul.mubr.f32.gmra.mxu0 %v631
        %v857 = vpop.f32.mrf.mxu0
        %v858 = vadd.f32 %v398, %v857
        %v859 = vpop.f32.mrf.mxu0
        %v860 = vadd.f32 %v398, %v859
        %861 = vmatprep.mubr.f32.mxu0 0.0
        %862 = vmatmul.mubr.f32.gmra.mxu0 %v634
        %v863 = vpop.f32.mrf.mxu0
        %v864 = vadd.f32 %v403, %v863
        %v865 = vpop.f32.mrf.mxu0
        %v866 = vadd.f32 %v403, %v865
        %867 = vmatprep.mubr.f32.mxu0 0.0
        %868 = vmatmul.mubr.f32.gmra.mxu0 %v637
        %v869 = vpop.f32.mrf.mxu0
        %v870 = vadd.f32 %v408, %v869
        %v871 = vpop.f32.mrf.mxu0
        %v872 = vadd.f32 %v408, %v871
        %873 = vmatprep.mubr.f32.mxu0 0.0
        %874 = vmatmul.mubr.f32.gmra.mxu0 %v640
        %v875 = vpop.f32.mrf.mxu0
        %v876 = vadd.f32 %v413, %v875
        %v877 = vpop.f32.mrf.mxu0
        %v878 = vadd.f32 %v413, %v877
        %879 = vmatprep.mubr.f32.mxu0 0.0
        %880 = vmatmul.mubr.f32.gmra.mxu0 %v643
        %v881 = vpop.f32.mrf.mxu0
        %v882 = vadd.f32 %v418, %v881
        %v883 = vpop.f32.mrf.mxu0
        %v884 = vadd.f32 %v418, %v883
        %885 = vmatprep.mubr.f32.mxu0 0.0
        %886 = vmatmul.mubr.f32.gmra.mxu0 %v646
        %v887 = vpop.f32.mrf.mxu0
        %v888 = vadd.f32 %v423, %v887
        %v889 = vpop.f32.mrf.mxu0
        %v890 = vadd.f32 %v423, %v889
        %891 = vmatprep.mubr.f32.mxu0 0.0
        %892 = vmatmul.mubr.f32.gmra.mxu0 %v649
        %v893 = vpop.f32.mrf.mxu0
        %v894 = vadd.f32 %v428, %v893
        %v895 = vpop.f32.mrf.mxu0
        %v896 = vadd.f32 %v428, %v895
        %897 = vmatprep.mubr.f32.mxu0 0.0
        %898 = vmatmul.mubr.f32.gmra.mxu0 %v652
        %v899 = vpop.f32.mrf.mxu0
        %v900 = vadd.f32 %v433, %v899
        %v901 = vpop.f32.mrf.mxu0
        %v902 = vadd.f32 %v433, %v901
        %903 = vmatprep.mubr.f32.mxu0 0.0
        %904 = vmatmul.mubr.f32.gmra.mxu0 %v655
        %v905 = vpop.f32.mrf.mxu0
        %v906 = vadd.f32 %v438, %v905
        %v907 = vpop.f32.mrf.mxu0
        %v908 = vadd.f32 %v438, %v907
        %909 = vmatprep.mubr.f32.mxu0 0.0
        %910 = vmatmul.mubr.f32.gmra.mxu0 %v658
        %v911 = vpop.f32.mrf.mxu0
        %v912 = vadd.f32 %v443, %v911
        %v913 = vpop.f32.mrf.mxu0
        %v914 = vadd.f32 %v443, %v913
        %915 = vmatprep.mubr.f32.mxu0 0.0
        %916 = vmatmul.mubr.f32.gmra.mxu0 %v661
        %v917 = vpop.f32.mrf.mxu0
        %v918 = vadd.f32 %v448, %v917
        %v919 = vpop.f32.mrf.mxu0
        %v920 = vadd.f32 %v448, %v919
        %921 = vmatprep.mubr.f32.mxu0 0.0
        %922 = vmatmul.mubr.f32.gmra.mxu0 %v664
        %v923 = vpop.f32.mrf.mxu0
        %v924 = vadd.f32 %v453, %v923
        %v925 = vpop.f32.mrf.mxu0
        %v926 = vadd.f32 %v453, %v925
        %927 = vmatprep.mubr.f32.mxu0 0.0
        %928 = vmatmul.mubr.f32.gmra.mxu0 %v667
        %v929 = vpop.f32.mrf.mxu0
        %v930 = vadd.f32 %v458, %v929
        %v931 = vpop.f32.mrf.mxu0
        %v932 = vadd.f32 %v458, %v931
        %933 = vmatprep.mubr.f32.mxu0 0.0
        %934 = vmatmul.mubr.f32.gmra.mxu0 %v670
        %v935 = vpop.f32.mrf.mxu0
        %v936 = vadd.f32 %v463, %v935
        %v937 = vpop.f32.mrf.mxu0
        %v938 = vadd.f32 %v463, %v937
        %939 = vmatprep.mubr.f32.mxu0 0.0
        %940 = vmatmul.mubr.f32.gmra.mxu0 %v673
        %v941 = vpop.f32.mrf.mxu0
        %v942 = vadd.f32 %v468, %v941
        %v943 = vpop.f32.mrf.mxu0
        %v944 = vadd.f32 %v468, %v943
        %945 = vmatprep.mubr.f32.mxu0 0.0
        %946 = vmatmul.mubr.f32.gmra.mxu0 %v676
        %v947 = vpop.f32.mrf.mxu0
        %v948 = vadd.f32 %v473, %v947
        %v949 = vpop.f32.mrf.mxu0
        %v950 = vadd.f32 %v473, %v949
        %951 = vmatprep.mubr.f32.mxu0 0.0
        %952 = vmatmul.mubr.f32.gmra.mxu0 %v679
        %v953 = vpop.f32.mrf.mxu0
        %v954 = vadd.f32 %v478, %v953
        %v955 = vpop.f32.mrf.mxu0
        %v956 = vadd.f32 %v478, %v955
        %957 = vmatprep.mubr.f32.mxu0 0.0
        %958 = vmatmul.mubr.f32.gmra.mxu0 %v682
        %v959 = vpop.f32.mrf.mxu0
        %v960 = vadd.f32 %v483, %v959
        %v961 = vpop.f32.mrf.mxu0
        %v962 = vadd.f32 %v483, %v961
        %963 = vmatprep.mubr.f32.mxu0 0.0
        %964 = vmatmul.mubr.f32.gmra.mxu0 %v685
        %v965 = vpop.f32.mrf.mxu0
        %v966 = vadd.f32 %v488, %v965
        %v967 = vpop.f32.mrf.mxu0
        %v968 = vadd.f32 %v488, %v967
        %969 = vmatprep.mubr.f32.mxu0 0.0
        %970 = vmatmul.mubr.f32.gmra.mxu0 %v688
        %v971 = vpop.f32.mrf.mxu0
        %v972 = vadd.f32 %v493, %v971
        %v973 = vpop.f32.mrf.mxu0
        %v974 = vadd.f32 %v493, %v973
        %975 = vmatprep.mubr.f32.mxu0 0.0
        %976 = vmatmul.mubr.f32.gmra.mxu0 %v691
        %v977 = vpop.f32.mrf.mxu0
        %v978 = vadd.f32 %v498, %v977
        %v979 = vpop.f32.mrf.mxu0
        %v980 = vadd.f32 %v498, %v979
        %981 = vmatprep.mubr.f32.mxu0 0.0
        %982 = vmatmul.mubr.f32.gmra.mxu0 %v694
        %v983 = vpop.f32.mrf.mxu0
        %v984 = vadd.f32 %v503, %v983
        %v985 = vpop.f32.mrf.mxu0
        %v986 = vadd.f32 %v503, %v985
        %987 = vmatprep.mubr.f32.mxu0 0.0
        %988 = vmatmul.mubr.f32.gmra.mxu0 %v697
        %v989 = vpop.f32.mrf.mxu0
        %v990 = vadd.f32 %v508, %v989
        %v991 = vpop.f32.mrf.mxu0
        %v992 = vadd.f32 %v508, %v991
        %993 = vmatprep.mubr.f32.mxu0 0.0
        %994 = vmatmul.mubr.f32.gmra.mxu0 %v700
        %v995 = vpop.f32.mrf.mxu0
        %v996 = vadd.f32 %v513, %v995
        %v997 = vpop.f32.mrf.mxu0
        %v998 = vadd.f32 %v513, %v997
        %999 = vmatprep.mubr.f32.mxu0 0.0
        %1000 = vmatmul.mubr.f32.gmra.mxu0 %v703
        %v1001 = vpop.f32.mrf.mxu0
        %v1002 = vadd.f32 %v518, %v1001
        %v1003 = vpop.f32.mrf.mxu0
        %v1004 = vadd.f32 %v518, %v1003
        %1005 = vmatprep.mubr.f32.mxu0 0.0
        %1006 = vmatmul.mubr.f32.gmra.mxu0 %v706
        %v1007 = vpop.f32.mrf.mxu0
        %v1008 = vadd.f32 %v523, %v1007
        %v1009 = vpop.f32.mrf.mxu0
        %v1010 = vadd.f32 %v523, %v1009
        %1011 = vmatprep.mubr.f32.mxu0 0.0
        %1012 = vmatmul.mubr.f32.gmra.mxu0 %v709
        %v1013 = vpop.f32.mrf.mxu0
        %v1014 = vadd.f32 %v528, %v1013
        %v1015 = vpop.f32.mrf.mxu0
        %v1016 = vadd.f32 %v528, %v1015
        %1017 = vmatprep.mubr.f32.mxu0 0.0
        %1018 = vmatmul.mubr.f32.gmra.mxu0 %v712
        %v1019 = vpop.f32.mrf.mxu0
        %v1020 = vadd.f32 %v533, %v1019
        %v1021 = vpop.f32.mrf.mxu0
        %v1022 = vadd.f32 %v533, %v1021
        %1023 = vmatprep.mubr.f32.mxu0 0.0
        %1024 = vmatmul.mubr.f32.gmra.mxu0 %v715
        %v1025 = vpop.f32.mrf.mxu0
        %v1026 = vadd.f32 %v538, %v1025
        %v1027 = vpop.f32.mrf.mxu0
        %v1028 = vadd.f32 %v538, %v1027
        %1029 = vmatprep.mubr.f32.mxu0 0.0
        %1030 = vmatmul.mubr.f32.gmra.mxu0 %v718
        %v1031 = vpop.f32.mrf.mxu0
        %v1032 = vadd.f32 %v543, %v1031
        %v1033 = vpop.f32.mrf.mxu0
        %v1034 = vadd.f32 %v543, %v1033
        %1035 = vmatprep.mubr.f32.mxu0 0.0
        %1036 = vmatmul.mubr.f32.gmra.mxu0 %v721
        %v1037 = vpop.f32.mrf.mxu0
        %v1038 = vadd.f32 %v548, %v1037
        %v1039 = vpop.f32.mrf.mxu0
        %v1040 = vadd.f32 %v548, %v1039
        %1041 = vmatprep.mubr.f32.mxu0 0.0
        %1042 = vmatmul.mubr.f32.gmra.mxu0 %v724
        %v1043 = vpop.f32.mrf.mxu0
        %v1044 = vadd.f32 %v553, %v1043
        %v1045 = vpop.f32.mrf.mxu0
        %v1046 = vadd.f32 %v553, %v1045
        %1047 = vmatprep.mubr.f32.mxu0 0.0
        %1048 = vmatmul.mubr.f32.gmra.mxu0 %v727
        %v1049 = vpop.f32.mrf.mxu0
        %v1050 = vadd.f32 %v558, %v1049
        %v1051 = vpop.f32.mrf.mxu0
        %v1052 = vadd.f32 %v558, %v1051
        %1053 = vmatprep.mubr.f32.mxu0 0.0
        %1054 = vmatmul.mubr.f32.gmra.mxu0 %v730
        %v1055 = vpop.f32.mrf.mxu0
        %v1056 = vadd.f32 %v563, %v1055
        %v1057 = vpop.f32.mrf.mxu0
        %v1058 = vadd.f32 %v563, %v1057
        %1059 = vmatprep.mubr.f32.mxu0 0.0
        %1060 = vmatmul.mubr.f32.gmra.mxu0 %v733
        %v1061 = vpop.f32.mrf.mxu0
        %v1062 = vadd.f32 %v568, %v1061
        %v1063 = vpop.f32.mrf.mxu0
        %v1064 = vadd.f32 %v568, %v1063
        %1065 = vmatprep.mubr.f32.mxu0 0.0
        %1066 = vmatmul.mubr.f32.gmra.mxu0 %v736
        %v1067 = vpop.f32.mrf.mxu0
        %v1068 = vadd.f32 %v573, %v1067
        %v1069 = vpop.f32.mrf.mxu0
        %v1070 = vadd.f32 %v573, %v1069
        %1071 = vmatprep.mubr.f32.mxu0 0.0
        %1072 = vmatmul.mubr.f32.gmra.mxu0 %v739
        %v1073 = vpop.f32.mrf.mxu0
        %v1074 = vadd.f32 %v578, %v1073
        %v1075 = vpop.f32.mrf.mxu0
        %v1076 = vadd.f32 %v578, %v1075
        %1077 = vmatprep.mubr.f32.mxu0 0.0
        %1078 = vmatmul.mubr.f32.gmra.mxu0 %v742
        %v1079 = vpop.f32.mrf.mxu0
        %v1080 = vadd.f32 %v583, %v1079
        %v1081 = vpop.f32.mrf.mxu0
        %v1082 = vadd.f32 %v583, %v1081
        %1083 = vmatprep.mubr.f32.mxu0 0.0
        %1084 = vmatmul.mubr.f32.gmra.mxu0 %v745
        %v1085 = vpop.f32.mrf.mxu0
        %v1086 = vadd.f32 %v588, %v1085
        %v1087 = vpop.f32.mrf.mxu0
        %v1088 = vadd.f32 %v588, %v1087
        %1089 = vmatprep.mubr.f32.mxu0 0.0
        %1090 = vmatmul.mubr.f32.gmra.mxu0 %v748
        %v1091 = vpop.f32.mrf.mxu0
        %v1092 = vadd.f32 %v593, %v1091
        %v1093 = vpop.f32.mrf.mxu0
        %v1094 = vadd.f32 %v593, %v1093
        %1095 = vmatprep.mubr.f32.mxu0 0.0
        %1096 = vmatmul.mubr.f32.gmra.mxu0 %v751
        %v1097 = vpop.f32.mrf.mxu0
        %v1098 = vadd.f32 %v598, %v1097
        %v1099 = vpop.f32.mrf.mxu0
        %v1100 = vadd.f32 %v598, %v1099
        %1101 = vmatprep.mubr.f32.mxu0 0.0
        %1102 = vmatmul.mubr.f32.gmra.mxu0 %v754
        %v1103 = vpop.f32.mrf.mxu0
        %v1104 = vadd.f32 %v603, %v1103
        %v1105 = vpop.f32.mrf.mxu0
        %v1106 = vadd.f32 %v603, %v1105
        %1107 = vmatprep.mubr.f32.mxu0 0.0
        %1108 = vmatmul.mubr.f32.gmra.mxu0 %v757
        %v1109 = vpop.f32.mrf.mxu0
        %v1110 = vadd.f32 %v608, %v1109
        %v1111 = vpop.f32.mrf.mxu0
        %v1112 = vadd.f32 %v608, %v1111
        %1113 = vmatprep.mubr.f32.mxu0 0.0
        %1114 = vmatmul.mubr.f32.gmra.mxu0 %v760
        %v1115 = vpop.f32.mrf.mxu0
        %v1116 = vadd.f32 %v613, %v1115
        %v1117 = vpop.f32.mrf.mxu0
        %v1118 = vadd.f32 %v613, %v1117
        %1119 = vdwg.mxu0
        %v1120 = vmul.f32 %v834, 1.4142135
        %v1121 = vmul.f32 %v836, 1.4142135
        %v1122 = vmul.f32 %v840, 1.4142135
        %v1123 = vmul.f32 %v842, 1.4142135
        %v1124 = vmul.f32 %v846, 1.4142135
        %v1125 = vmul.f32 %v848, 1.4142135
        %v1126 = vmul.f32 %v852, 1.4142135
        %v1127 = vmul.f32 %v854, 1.4142135
        %v1128 = vmul.f32 %v858, 1.4142135
        %v1129 = vmul.f32 %v860, 1.4142135
        %v1130 = vmul.f32 %v864, 1.4142135
        %v1131 = vmul.f32 %v866, 1.4142135
        %v1132 = vmul.f32 %v870, 1.4142135
        %v1133 = vmul.f32 %v872, 1.4142135
        %v1134 = vmul.f32 %v876, 1.4142135
        %v1135 = vmul.f32 %v878, 1.4142135
        %v1136 = vmul.f32 %v882, 1.4142135
        %v1137 = vmul.f32 %v884, 1.4142135
        %v1138 = vmul.f32 %v888, 1.4142135
        %v1139 = vmul.f32 %v890, 1.4142135
        %v1140 = vmul.f32 %v894, 1.4142135
        %v1141 = vmul.f32 %v896, 1.4142135
        %v1142 = vmul.f32 %v900, 1.4142135
        %v1143 = vmul.f32 %v902, 1.4142135
        %v1144 = vmul.f32 %v906, 1.4142135
        %v1145 = vmul.f32 %v908, 1.4142135
        %v1146 = vmul.f32 %v912, 1.4142135
        %v1147 = vmul.f32 %v914, 1.4142135
        %v1148 = vmul.f32 %v918, 1.4142135
        %v1149 = vmul.f32 %v920, 1.4142135
        %v1150 = vmul.f32 %v924, 1.4142135
        %v1151 = vmul.f32 %v926, 1.4142135
        %1152 = vst [vmem:[%s250] sm:$0xff] %v1120
        %1153 = vst [vmem:[%s250 + $0x8] sm:$0xff] %v1121
        %1154 = vst [vmem:[%s250 + $0x10] sm:$0xff] %v1122
        %1155 = vst [vmem:[%s250 + $0x18] sm:$0xff] %v1123
        %1156 = vst [vmem:[%s250 + $0x20] sm:$0xff] %v1124
        %1157 = vst [vmem:[%s250 + $0x28] sm:$0xff] %v1125
        %1158 = vst [vmem:[%s250 + $0x30] sm:$0xff] %v1126
        %1159 = vst [vmem:[%s250 + $0x38] sm:$0xff] %v1127
        %1160 = vst [vmem:[%s250 + $0x40] sm:$0xff] %v1128
        %1161 = vst [vmem:[%s250 + $0x48] sm:$0xff] %v1129
        %1162 = vst [vmem:[%s250 + $0x50] sm:$0xff] %v1130
        %1163 = vst [vmem:[%s250 + $0x58] sm:$0xff] %v1131
        %1164 = vst [vmem:[%s250 + $0x60] sm:$0xff] %v1132
        %1165 = vst [vmem:[%s250 + $0x68] sm:$0xff] %v1133
        %1166 = vst [vmem:[%s250 + $0x70] sm:$0xff] %v1134
        %1167 = vst [vmem:[%s250 + $0x78] sm:$0xff] %v1135
        %1168 = vst [vmem:[%s250 + $0x80] sm:$0xff] %v1136
        %1169 = vst [vmem:[%s250 + $0x88] sm:$0xff] %v1137
        %1170 = vst [vmem:[%s250 + $0x90] sm:$0xff] %v1138
        %1171 = vst [vmem:[%s250 + $0x98] sm:$0xff] %v1139
        %1172 = vst [vmem:[%s250 + $0xa0] sm:$0xff] %v1140
        %1173 = vst [vmem:[%s250 + $0xa8] sm:$0xff] %v1141
        %1174 = vst [vmem:[%s250 + $0xb0] sm:$0xff] %v1142
        %1175 = vst [vmem:[%s250 + $0xb8] sm:$0xff] %v1143
        %1176 = vst [vmem:[%s250 + $0xc0] sm:$0xff] %v1144
        %1177 = vst [vmem:[%s250 + $0xc8] sm:$0xff] %v1145
        %1178 = vst [vmem:[%s250 + $0xd0] sm:$0xff] %v1146
        %1179 = vst [vmem:[%s250 + $0xd8] sm:$0xff] %v1147
        %1180 = vst [vmem:[%s250 + $0xe0] sm:$0xff] %v1148
        %1181 = vst [vmem:[%s250 + $0xe8] sm:$0xff] %v1149
        %1182 = vst [vmem:[%s250 + $0xf0] sm:$0xff] %v1150
        %1183 = vst [vmem:[%s250 + $0xf8] sm:$0xff] %v1151
        %1184 = vst [vmem:[%s257] sm:$0xff] %v930
        %1185 = vst [vmem:[%s257 + $0x8] sm:$0xff] %v932
        %1186 = vst [vmem:[%s257 + $0x10] sm:$0xff] %v936
        %1187 = vst [vmem:[%s257 + $0x18] sm:$0xff] %v938
        %1188 = vst [vmem:[%s257 + $0x20] sm:$0xff] %v942
        %1189 = vst [vmem:[%s257 + $0x28] sm:$0xff] %v944
        %1190 = vst [vmem:[%s257 + $0x30] sm:$0xff] %v948
        %1191 = vst [vmem:[%s257 + $0x38] sm:$0xff] %v950
        %1192 = vst [vmem:[%s257 + $0x40] sm:$0xff] %v954
        %1193 = vst [vmem:[%s257 + $0x48] sm:$0xff] %v956
        %1194 = vst [vmem:[%s257 + $0x50] sm:$0xff] %v960
        %1195 = vst [vmem:[%s257 + $0x58] sm:$0xff] %v962
        %1196 = vst [vmem:[%s257 + $0x60] sm:$0xff] %v966
        %1197 = vst [vmem:[%s257 + $0x68] sm:$0xff] %v968
        %1198 = vst [vmem:[%s257 + $0x70] sm:$0xff] %v972
        %1199 = vst [vmem:[%s257 + $0x78] sm:$0xff] %v974
        %1200 = vst [vmem:[%s257 + $0x80] sm:$0xff] %v978
        %1201 = vst [vmem:[%s257 + $0x88] sm:$0xff] %v980
        %1202 = vst [vmem:[%s257 + $0x90] sm:$0xff] %v984
        %1203 = vst [vmem:[%s257 + $0x98] sm:$0xff] %v986
        %1204 = vst [vmem:[%s257 + $0xa0] sm:$0xff] %v990
        %1205 = vst [vmem:[%s257 + $0xa8] sm:$0xff] %v992
        %1206 = vst [vmem:[%s257 + $0xb0] sm:$0xff] %v996
        %1207 = vst [vmem:[%s257 + $0xb8] sm:$0xff] %v998
        %1208 = vst [vmem:[%s257 + $0xc0] sm:$0xff] %v1002
        %1209 = vst [vmem:[%s257 + $0xc8] sm:$0xff] %v1004
        %1210 = vst [vmem:[%s257 + $0xd0] sm:$0xff] %v1008
        %1211 = vst [vmem:[%s257 + $0xd8] sm:$0xff] %v1010
        %1212 = vst [vmem:[%s257 + $0xe0] sm:$0xff] %v1014
        %1213 = vst [vmem:[%s257 + $0xe8] sm:$0xff] %v1016
        %1214 = vst [vmem:[%s257 + $0xf0] sm:$0xff] %v1020
        %1215 = vst [vmem:[%s257 + $0xf8] sm:$0xff] %v1022
        %1216 = vst [vmem:[%s264] sm:$0xff] %v1026
        %1217 = vst [vmem:[%s264 + $0x8] sm:$0xff] %v1028
        %1218 = vst [vmem:[%s264 + $0x10] sm:$0xff] %v1032
        %1219 = vst [vmem:[%s264 + $0x18] sm:$0xff] %v1034
        %1220 = vst [vmem:[%s264 + $0x20] sm:$0xff] %v1038
        %1221 = vst [vmem:[%s264 + $0x28] sm:$0xff] %v1040
        %1222 = vst [vmem:[%s264 + $0x30] sm:$0xff] %v1044
        %1223 = vst [vmem:[%s264 + $0x38] sm:$0xff] %v1046
        %1224 = vst [vmem:[%s264 + $0x40] sm:$0xff] %v1050
        %1225 = vst [vmem:[%s264 + $0x48] sm:$0xff] %v1052
        %1226 = vst [vmem:[%s264 + $0x50] sm:$0xff] %v1056
        %1227 = vst [vmem:[%s264 + $0x58] sm:$0xff] %v1058
        %1228 = vst [vmem:[%s264 + $0x60] sm:$0xff] %v1062
        %1229 = vst [vmem:[%s264 + $0x68] sm:$0xff] %v1064
        %1230 = vst [vmem:[%s264 + $0x70] sm:$0xff] %v1068
        %1231 = vst [vmem:[%s264 + $0x78] sm:$0xff] %v1070
        %1232 = vst [vmem:[%s264 + $0x80] sm:$0xff] %v1074
        %1233 = vst [vmem:[%s264 + $0x88] sm:$0xff] %v1076
        %1234 = vst [vmem:[%s264 + $0x90] sm:$0xff] %v1080
        %1235 = vst [vmem:[%s264 + $0x98] sm:$0xff] %v1082
        %1236 = vst [vmem:[%s264 + $0xa0] sm:$0xff] %v1086
        %1237 = vst [vmem:[%s264 + $0xa8] sm:$0xff] %v1088
        %1238 = vst [vmem:[%s264 + $0xb0] sm:$0xff] %v1092
        %1239 = vst [vmem:[%s264 + $0xb8] sm:$0xff] %v1094
        %1240 = vst [vmem:[%s264 + $0xc0] sm:$0xff] %v1098
        %1241 = vst [vmem:[%s264 + $0xc8] sm:$0xff] %v1100
        %1242 = vst [vmem:[%s264 + $0xd0] sm:$0xff] %v1104
        %1243 = vst [vmem:[%s264 + $0xd8] sm:$0xff] %v1106
        %1244 = vst [vmem:[%s264 + $0xe0] sm:$0xff] %v1110
        %1245 = vst [vmem:[%s264 + $0xe8] sm:$0xff] %v1112
        %1246 = vst [vmem:[%s264 + $0xf0] sm:$0xff] %v1116
        %1247 = vst [vmem:[%s264 + $0xf8] sm:$0xff] %v1118
        %s1248 = sand.u32 %s115, 1
        %s1249 = scalar_lea.sflag [#allocation3], %s1248
        %s1250 = sand.u32 %s115, 1
        %s1251 = smul.addr %s1250, 256
        %s1252 = scalar_lea.vmem [#allocation2], %s1251
        %s1253 = sand.u32 %s23, 1
        %s1254 = scalar_lea.sflag [#allocation5], %s1253
        %s1255 = sand.u32 %s143, 1
        %s1256 = smul.addr %s1255, 256
        %s1257 = scalar_lea.vmem [#allocation4], %s1256
        %s1258 = sand.u32 %s23, 1
        %s1259 = scalar_lea.sflag [#allocation5], %s1258
        %s1260 = sand.u32 %s171, 1
        %s1261 = smul.addr %s1260, 256
        %s1262 = scalar_lea.vmem [#allocation6], %s1261
        // Predicated region
        $region33: #{tpu_custom_call.1} parent=31 // pred_check
          %p1263 = pneg %p125
        $region34: #{tpu_custom_call.1} parent=31 // pred_check_branch
          %1265 = sbr.rel (%p1263) target = $region36
        $region35: #{tpu_custom_call.1} parent=31 // pred_region
          %s1266 = smul.u32 2, %s28
          %s1268 = ssub.s32 4096, 4096
          %1269 = vsyncadd %s1249, %s1268
          %s1270 = smul.addr %s27, 32
          %s1271 = sadd.s32 %s1266, %s1270
          %s1272 = smul.addr %s1271, 128
          %s1273 = scalar_lea.hbm %s3, %s1272
          %s1274 = sshll.u32 %s1252, 4
          %s1275 = int_to_ptr.vmem [resolvable:$true] %s1274
          %1280 = dma.vmem_to_hbm [thread:$0]  %s1275, 4096, %s1273, %s1249, 256, 256, 16
        $region36: #{tpu_custom_call.1} parent=31 // pred_fallthru
          _
        // Predicated region
        $region37: #{tpu_custom_call.1} parent=31 // pred_check
          %p1281 = pneg %p153
        $region38: #{tpu_custom_call.1} parent=31 // pred_check_branch
          %1283 = sbr.rel (%p1281) target = $region40
        $region39: #{tpu_custom_call.1} parent=31 // pred_region
          %s1284 = smul.u32 2, %s28
          %s1286 = ssub.s32 4096, 4096
          %1287 = vsyncadd %s1254, %s1286
          %s1288 = smul.addr %s27, 32
          %s1289 = sadd.s32 %s1284, %s1288
          %s1290 = smul.addr %s1289, 128
          %s1291 = scalar_lea.hbm %s4, %s1290
          %s1292 = sshll.u32 %s1257, 4
          %s1293 = int_to_ptr.vmem [resolvable:$true] %s1292
          %1298 = dma.vmem_to_hbm [thread:$0]  %s1293, 4096, %s1291, %s1254, 256, 256, 16
        $region40: #{tpu_custom_call.1} parent=31 // pred_fallthru
          _
        // Predicated region
        $region41: #{tpu_custom_call.1} parent=31 // pred_check
          %p1299 = pneg %p181
        $region42: #{tpu_custom_call.1} parent=31 // pred_check_branch
          %1301 = sbr.rel (%p1299) target = $region44
        $region43: #{tpu_custom_call.1} parent=31 // pred_region
          %s1302 = smul.u32 2, %s28
          %s1304 = ssub.s32 4096, 4096
          %1305 = vsyncadd %s1259, %s1304
          %s1306 = smul.addr %s27, 32
          %s1307 = sadd.s32 %s1302, %s1306
          %s1308 = smul.addr %s1307, 128
          %s1309 = scalar_lea.hbm %s5, %s1308
          %s1310 = sshll.u32 %s1262, 4
          %s1311 = int_to_ptr.vmem [resolvable:$true] %s1310
          %1316 = dma.vmem_to_hbm [thread:$0]  %s1311, 4096, %s1309, %s1259, 256, 256, 16
        $region44: #{tpu_custom_call.1} parent=31 // pred_fallthru
          _
      $region32: #{tpu_custom_call.1} parent=5 // pred_fallthru
        _
      %p1317 = scmp.le.s32.totalorder 2, %s18
      // Predicated region
      $region45: #{tpu_custom_call.1} parent=5 // pred_check
        %p1318 = pneg %p1317
      $region46: #{tpu_custom_call.1} parent=5 // pred_check_branch
        %1320 = sbr.rel (%p1318) target = $region48
      $region47: #{tpu_custom_call.1} parent=5 // pred_region
        %s1321 = ssub.s32 %s18, 2
        // Predicated region
        $region49: #{tpu_custom_call.1} parent=47 // pred_check
          %p1322 = pneg %p131
        $region50: #{tpu_custom_call.1} parent=47 // pred_check_branch
          %1324 = sbr.rel (%p1322) target = $region52
        $region51: #{tpu_custom_call.1} parent=47 // pred_region
          %s1325 = sand.u32 %s116, 1
          %s1326 = scalar_lea.sflag [#allocation3], %s1325
          %s1327 = sand.u32 %s116, 1
          %s1328 = smul.addr %s1327, 256
          %s1329 = scalar_lea.vmem [#allocation2], %s1328
          %1330 = dma.done %s1326, 4096
        $region52: #{tpu_custom_call.1} parent=47 // pred_fallthru
          _
        // Predicated region
        $region53: #{tpu_custom_call.1} parent=47 // pred_check
          %p1331 = pneg %p159
        $region54: #{tpu_custom_call.1} parent=47 // pred_check_branch
          %1333 = sbr.rel (%p1331) target = $region56
        $region55: #{tpu_custom_call.1} parent=47 // pred_region
          %s1334 = sand.u32 %s24, 1
          %s1335 = scalar_lea.sflag [#allocation5], %s1334
          %s1336 = sand.u32 %s144, 1
          %s1337 = smul.addr %s1336, 256
          %s1338 = scalar_lea.vmem [#allocation4], %s1337
          %1339 = dma.done %s1335, 4096
        $region56: #{tpu_custom_call.1} parent=47 // pred_fallthru
          _
        // Predicated region
        $region57: #{tpu_custom_call.1} parent=47 // pred_check
          %p1340 = pneg %p187
        $region58: #{tpu_custom_call.1} parent=47 // pred_check_branch
          %1342 = sbr.rel (%p1340) target = $region60
        $region59: #{tpu_custom_call.1} parent=47 // pred_region
          %s1343 = sand.u32 %s24, 1
          %s1344 = scalar_lea.sflag [#allocation5], %s1343
          %s1345 = sand.u32 %s172, 1
          %s1346 = smul.addr %s1345, 256
          %s1347 = scalar_lea.vmem [#allocation6], %s1346
          %1348 = dma.done %s1344, 4096
        $region60: #{tpu_custom_call.1} parent=47 // pred_fallthru
          _
      $region48: #{tpu_custom_call.1} parent=5 // pred_fallthru
        _
    $region6: #{tpu_custom_call.1} parent=1 // loop_footer
      %s22 = sadd.s32 1, %s18
    $region7: #{tpu_custom_call.1} parent=1 // loop_footer_branch
      %17 = sbr.rel target = $region3
    $region8: #{tpu_custom_call.1} parent=1 // loop_exit
      _
    %1349 = vsyncpa [#allocation3], 1
    %s1350 = scalar_lea.sflag [#allocation3], 1
    %1351 = vsyncpa %s1350, 1
    %1352 = vsyncpa [#allocation5], 1
    %s1353 = scalar_lea.sflag [#allocation5], 1
    %1354 = vsyncpa %s1353, 1

</llo_original>
